<compile_context>
chip_gen: v7x
topology: tpu7x:2x2x1
jax: 0.10.0
libtpu: 0.0.40
codegen_flags: <defaults>
</compile_context>

<pallas_src>
import functools

import jax
import jax.numpy as jnp
from jax.experimental import pallas as pl
from jax.experimental.pallas import tpu as pltpu

H1 = 256   # fc1 width
H2 = 128   # fc2 width


def actor_critic_kernel(x_ref, w1_ref, b1_ref, w2_ref, b2_ref,
                        wh_ref, bh_ref, out_ref, *, out_dim):
    # fc1 + relu  (bf16 MXU operands, f32 accumulate, f32 elementwise)
    h1 = jnp.dot(x_ref[...], w1_ref[...], preferred_element_type=jnp.float32)
    h1 = jnp.maximum(h1 + b1_ref[...], 0.0).astype(jnp.bfloat16)

    # fc2 + relu
    h2 = jnp.dot(h1, w2_ref[...], preferred_element_type=jnp.float32)
    h2 = jnp.maximum(h2 + b2_ref[...], 0.0).astype(jnp.bfloat16)

    # fused heads: one MXU pass -> [mean | log_std | value | zero padding]
    head = jnp.dot(h2, wh_ref[...], preferred_element_type=jnp.float32) + bh_ref[...]

    # exp only on the log_std lanes; lane-only (1, head_pad) mask, broadcast
    # along sublanes inside the select (exp runs on the EUP slot).
    lane = jax.lax.broadcasted_iota(jnp.int32, (1, head.shape[1]), 1)
    std_mask = (lane >= out_dim) & (lane < 2 * out_dim)
    out_ref[...] = jnp.where(std_mask, jnp.exp(head), head).astype(out_ref.dtype)


def prepare_params(params):
    """One-time packing of the three heads into a lane-dense [H2, 128k] slab."""
    out_dim = params["wm"].shape[1]
    head_pad = 128 * pl.cdiv(2 * out_dim + 1, 128)   # lane-dense head width

    wh = jnp.zeros((H2, head_pad), jnp.bfloat16)
    wh = wh.at[:, :out_dim].set(params["wm"])
    wh = wh.at[:, out_dim:2 * out_dim].set(params["ws"])
    wh = wh.at[:, 2 * out_dim:2 * out_dim + 1].set(params["wc"])

    bh = jnp.zeros((1, head_pad), jnp.float32)
    bh = bh.at[:, :out_dim].set(params["bm"])
    bh = bh.at[:, out_dim:2 * out_dim].set(params["bs"])
    bh = bh.at[:, 2 * out_dim:2 * out_dim + 1].set(params["bc"])

    packed = dict(w1=params["w1"], b1=params["b1"],
                  w2=params["w2"], b2=params["b2"], wh=wh, bh=bh)
    return packed, out_dim


def _round_up(n, m):
    return ((n + m - 1) // m) * m


def _batch_tile(B, tile_b=4096):
    """Large tiles, but keep >=4 grid steps for big B so both v7x TCs work."""
    if B <= 512:
        return B
    return min(tile_b, max(512, _round_up(pl.cdiv(B, 4), 16)))


@functools.partial(jax.jit, static_argnames=("out_dim",))
def actor_critic_forward(x, packed, *, out_dim):
    """x: [B, input_dim] f32. Returns (action_mean, action_std, state_value)."""
    B, input_dim = x.shape
    head_pad = packed["wh"].shape[1]

    tb = _batch_tile(B)
    grid = (pl.cdiv(B, tb),)

    def batch_spec(shape):
        return pl.BlockSpec(shape, lambda b: (b, 0))

    def resident_spec(shape):
        return pl.BlockSpec(shape, lambda b: (0, 0))   # weights stay in VMEM

    flops = 2 * B * (input_dim * H1 + H1 * H2 + H2 * head_pad)
    bytes_accessed = (B * input_dim * 2 + B * head_pad * 2
                      + (input_dim * H1 + H1 * H2 + H2 * head_pad) * 2
                      + (H1 + H2 + head_pad) * 4)
    cost = pl.CostEstimate(flops=flops, transcendentals=B * head_pad,
                           bytes_accessed=bytes_accessed)

    slab = pl.pallas_call(
        functools.partial(actor_critic_kernel, out_dim=out_dim),
        out_shape=jax.ShapeDtypeStruct((B, head_pad), jnp.bfloat16),
        grid=grid,
        in_specs=[
            batch_spec((tb, input_dim)),
            resident_spec((input_dim, H1)), resident_spec((1, H1)),
            resident_spec((H1, H2)), resident_spec((1, H2)),
            resident_spec((H2, head_pad)), resident_spec((1, head_pad)),
        ],
        out_specs=batch_spec((tb, head_pad)),
        compiler_params=pltpu.CompilerParams(
            dimension_semantics=("parallel",),   # shard batch tiles across TCs
        ),
        cost_estimate=cost,
    )(x.astype(jnp.bfloat16),
      packed["w1"], packed["b1"], packed["w2"], packed["b2"],
      packed["wh"], packed["bh"])

    # Slices stay inside this jit so XLA fuses them with the slab writeback
    # (no extra HBM round trip).
    action_mean = slab[:, :out_dim]
    action_std = slab[:, out_dim:2 * out_dim]
    state_value = slab[:, 2 * out_dim:2 * out_dim + 1]
    return action_mean, action_std, state_value


def init_params(key, input_dim, output_dim):
    """PyTorch-style uniform(-1/sqrt(fan_in), 1/sqrt(fan_in)) init.

    Weights stored [in, out] in bf16 (MXU operands); biases [1, out] in f32.
    """
    def linear(key, fan_in, fan_out):
        kw, kb = jax.random.split(key)
        bound = 1.0 / jnp.sqrt(fan_in)
        w = jax.random.uniform(kw, (fan_in, fan_out), jnp.float32, -bound, bound)
        b = jax.random.uniform(kb, (1, fan_out), jnp.float32, -bound, bound)
        return w.astype(jnp.bfloat16), b

    k1, k2, k3, k4, k5 = jax.random.split(key, 5)
    w1, b1 = linear(k1, input_dim, H1)
    w2, b2 = linear(k2, H1, H2)
    wm, bm = linear(k3, H2, output_dim)
    ws, bs = linear(k4, H2, output_dim)
    wc, bc = linear(k5, H2, 1)
    return dict(w1=w1, b1=b1, w2=w2, b2=b2, wm=wm, bm=bm, ws=ws, bs=bs,
                wc=wc, bc=bc)


def reference_forward(x, p):
    """Pure-JAX reference with identical bf16-operand / f32-accumulate math."""
    xb = x.astype(jnp.bfloat16)
    h1 = jnp.maximum(
        jnp.dot(xb, p["w1"], preferred_element_type=jnp.float32) + p["b1"], 0.0)
    h2 = jnp.maximum(
        jnp.dot(h1.astype(jnp.bfloat16), p["w2"],
                preferred_element_type=jnp.float32) + p["b2"], 0.0)
    h2b = h2.astype(jnp.bfloat16)
    mean = jnp.dot(h2b, p["wm"], preferred_element_type=jnp.float32) + p["bm"]
    std = jnp.exp(jnp.dot(h2b, p["ws"], preferred_element_type=jnp.float32) + p["bs"])
    value = jnp.dot(h2b, p["wc"], preferred_element_type=jnp.float32) + p["bc"]
    return mean, std, value


if __name__ == "__main__":
    key = jax.random.PRNGKey(0)
    k_params, k_x = jax.random.split(key)

    B = 8           # batch
    INPUT_DIM = 16  # observation dim
    OUTPUT_DIM = 4  # action dim

    params = init_params(k_params, INPUT_DIM, OUTPUT_DIM)
    packed, out_dim = prepare_params(params)        # one-time head packing
    x = jax.random.normal(k_x, (B, INPUT_DIM), jnp.float32)

    mean, std, value = actor_critic_forward(x, packed, out_dim=out_dim)
    jax.block_until_ready((mean, std, value))

    # Correctness check against pure-JAX reference (same bf16/f32 math;
    # kernel output is bf16, so tolerances are loosened accordingly).
    ref_mean, ref_std, ref_value = reference_forward(x, params)
    assert jnp.allclose(mean.astype(jnp.float32), ref_mean, atol=2e-2, rtol=2e-2)
    assert jnp.allclose(std.astype(jnp.float32), ref_std, atol=2e-2, rtol=2e-2)
    assert jnp.allclose(value.astype(jnp.float32), ref_value, atol=2e-2, rtol=2e-2)
    assert mean.shape == (B, OUTPUT_DIM)
    assert std.shape == (B, OUTPUT_DIM)
    assert value.shape == (B, 1)

    print("KERNEL_OK")
</pallas_src>

<mosaic_0001>
module attributes {stable_mosaic.version = 11 : i64} {
  func.func @actor_critic_kernel(%arg0: i32, %arg1: memref<8x16xbf16, #tpu.memory_space<vmem>>, %arg2: memref<16x256xbf16, #tpu.memory_space<vmem>>, %arg3: memref<1x256xf32, #tpu.memory_space<vmem>>, %arg4: memref<256x128xbf16, #tpu.memory_space<vmem>>, %arg5: memref<1x128xf32, #tpu.memory_space<vmem>>, %arg6: memref<128x128xbf16, #tpu.memory_space<vmem>>, %arg7: memref<1x128xf32, #tpu.memory_space<vmem>>, %arg8: memref<8x128xbf16, #tpu.memory_space<vmem>>) attributes {dimension_semantics = [#tpu.dimension_semantics<parallel>], iteration_bounds = array<i64: 1>, scalar_prefetch = 0 : i64, scratch_operands = 0 : i64, tpu.core_type = #tpu.core_type<tc>, window_params = [{transform_indices = @transform_0, window_bounds = array<i64: 8, 16>}, {pipeline_mode = #tpu.pipeline_mode<synchronous>, transform_indices = @transform_1, window_bounds = array<i64: 16, 256>}, {pipeline_mode = #tpu.pipeline_mode<synchronous>, transform_indices = @transform_2, window_bounds = array<i64: 1, 256>}, {pipeline_mode = #tpu.pipeline_mode<synchronous>, transform_indices = @transform_3, window_bounds = array<i64: 256, 128>}, {pipeline_mode = #tpu.pipeline_mode<synchronous>, transform_indices = @transform_4, window_bounds = array<i64: 1, 128>}, {pipeline_mode = #tpu.pipeline_mode<synchronous>, transform_indices = @transform_5, window_bounds = array<i64: 128, 128>}, {pipeline_mode = #tpu.pipeline_mode<synchronous>, transform_indices = @transform_6, window_bounds = array<i64: 1, 128>}, {transform_indices = @transform_7, window_bounds = array<i64: 8, 128>}]} {
    %c0 = arith.constant 0 : index
    %c0_0 = arith.constant 0 : index
    %0 = vector.load %arg1[%c0, %c0_0] : memref<8x16xbf16, #tpu.memory_space<vmem>>, vector<8x16xbf16>
    %c0_1 = arith.constant 0 : index
    %c0_2 = arith.constant 0 : index
    %1 = vector.load %arg2[%c0_1, %c0_2] : memref<16x256xbf16, #tpu.memory_space<vmem>>, vector<16x256xbf16>
    %cst = arith.constant dense<0.000000e+00> : vector<8x256xf32>
    %2 = tpu.matmul %0, %1, %cst {dimension_numbers = #tpu.dot_dimension_numbers<[1], [0], [0], [1], [0, 0, 1, 1], [], []>} : vector<8x16xbf16>, vector<16x256xbf16>, vector<8x256xf32> -> vector<8x256xf32>
    %c0_3 = arith.constant 0 : index
    %c0_4 = arith.constant 0 : index
    %3 = vector.load %arg3[%c0_3, %c0_4] : memref<1x256xf32, #tpu.memory_space<vmem>>, vector<1x256xf32>
    %4 = vector.broadcast %3 : vector<1x256xf32> to vector<8x256xf32>
    %5 = arith.addf %2, %4 : vector<8x256xf32>
    %cst_5 = arith.constant 0.000000e+00 : f32
    %6 = vector.broadcast %cst_5 : f32 to vector<8x256xf32>
    %7 = arith.maximumf %5, %6 : vector<8x256xf32>
    %8 = arith.truncf %7 : vector<8x256xf32> to vector<8x256xbf16>
    %c0_6 = arith.constant 0 : index
    %c0_7 = arith.constant 0 : index
    %9 = vector.load %arg4[%c0_6, %c0_7] : memref<256x128xbf16, #tpu.memory_space<vmem>>, vector<256x128xbf16>
    %cst_8 = arith.constant dense<0.000000e+00> : vector<8x128xf32>
    %10 = tpu.matmul %8, %9, %cst_8 {dimension_numbers = #tpu.dot_dimension_numbers<[1], [0], [0], [1], [0, 0, 1, 1], [], []>} : vector<8x256xbf16>, vector<256x128xbf16>, vector<8x128xf32> -> vector<8x128xf32>
    %c0_9 = arith.constant 0 : index
    %c0_10 = arith.constant 0 : index
    %11 = vector.load %arg5[%c0_9, %c0_10] : memref<1x128xf32, #tpu.memory_space<vmem>>, vector<1x128xf32>
    %12 = vector.broadcast %11 : vector<1x128xf32> to vector<8x128xf32>
    %13 = arith.addf %10, %12 : vector<8x128xf32>
    %cst_11 = arith.constant 0.000000e+00 : f32
    %14 = vector.broadcast %cst_11 : f32 to vector<8x128xf32>
    %15 = arith.maximumf %13, %14 : vector<8x128xf32>
    %16 = arith.truncf %15 : vector<8x128xf32> to vector<8x128xbf16>
    %c0_12 = arith.constant 0 : index
    %c0_13 = arith.constant 0 : index
    %17 = vector.load %arg6[%c0_12, %c0_13] : memref<128x128xbf16, #tpu.memory_space<vmem>>, vector<128x128xbf16>
    %cst_14 = arith.constant dense<0.000000e+00> : vector<8x128xf32>
    %18 = tpu.matmul %16, %17, %cst_14 {dimension_numbers = #tpu.dot_dimension_numbers<[1], [0], [0], [1], [0, 0, 1, 1], [], []>} : vector<8x128xbf16>, vector<128x128xbf16>, vector<8x128xf32> -> vector<8x128xf32>
    %c0_15 = arith.constant 0 : index
    %c0_16 = arith.constant 0 : index
    %19 = vector.load %arg7[%c0_15, %c0_16] : memref<1x128xf32, #tpu.memory_space<vmem>>, vector<1x128xf32>
    %20 = vector.broadcast %19 : vector<1x128xf32> to vector<8x128xf32>
    %21 = arith.addf %18, %20 : vector<8x128xf32>
    %22 = tpu.iota {dimensions = array<i32: 1>} : vector<1x128xi32>
    %c4_i32 = arith.constant 4 : i32
    %23 = vector.broadcast %c4_i32 : i32 to vector<1x128xi32>
    %24 = arith.cmpi sge, %22, %23 : vector<1x128xi32>
    %c8_i32 = arith.constant 8 : i32
    %25 = vector.broadcast %c8_i32 : i32 to vector<1x128xi32>
    %26 = arith.cmpi slt, %22, %25 : vector<1x128xi32>
    %27 = arith.andi %24, %26 : vector<1x128xi1>
    %28 = math.exp %21 : vector<8x128xf32>
    %29 = vector.shape_cast %27 : vector<1x128xi1> to vector<1x128xi1>
    %30 = vector.broadcast %29 : vector<1x128xi1> to vector<8x128xi1>
    %31 = arith.select %30, %28, %21 : vector<8x128xi1>, vector<8x128xf32>
    %32 = arith.truncf %31 : vector<8x128xf32> to vector<8x128xbf16>
    %c0_17 = arith.constant 0 : index
    %c0_18 = arith.constant 0 : index
    %33 = vector.load %arg8[%c0_17, %c0_18] : memref<8x128xbf16, #tpu.memory_space<vmem>>, vector<8x128xbf16>
    tpu.vector_store %arg8[%c0_17, %c0_18], %32 {strides = array<i32>} : memref<8x128xbf16, #tpu.memory_space<vmem>>, vector<8x128xbf16>,
    return
  }
  func.func @transform_0(%arg0: i32) -> (i32, i32) {
    %c0_i32 = arith.constant 0 : i32
    %c0_i32_0 = arith.constant 0 : i32
    return %arg0, %c0_i32 : i32, i32
  }
  func.func @transform_1(%arg0: i32) -> (i32, i32) {
    %c0_i32 = arith.constant 0 : i32
    %c0_i32_0 = arith.constant 0 : i32
    %c0_i32_1 = arith.constant 0 : i32
    return %c0_i32, %c0_i32_0 : i32, i32
  }
  func.func @transform_2(%arg0: i32) -> (i32, i32) {
    %c0_i32 = arith.constant 0 : i32
    %c0_i32_0 = arith.constant 0 : i32
    %c0_i32_1 = arith.constant 0 : i32
    return %c0_i32, %c0_i32_0 : i32, i32
  }
  func.func @transform_3(%arg0: i32) -> (i32, i32) {
    %c0_i32 = arith.constant 0 : i32
    %c0_i32_0 = arith.constant 0 : i32
    %c0_i32_1 = arith.constant 0 : i32
    return %c0_i32, %c0_i32_0 : i32, i32
  }
  func.func @transform_4(%arg0: i32) -> (i32, i32) {
    %c0_i32 = arith.constant 0 : i32
    %c0_i32_0 = arith.constant 0 : i32
    %c0_i32_1 = arith.constant 0 : i32
    return %c0_i32, %c0_i32_0 : i32, i32
  }
  func.func @transform_5(%arg0: i32) -> (i32, i32) {
    %c0_i32 = arith.constant 0 : i32
    %c0_i32_0 = arith.constant 0 : i32
    %c0_i32_1 = arith.constant 0 : i32
    return %c0_i32, %c0_i32_0 : i32, i32
  }
  func.func @transform_6(%arg0: i32) -> (i32, i32) {
    %c0_i32 = arith.constant 0 : i32
    %c0_i32_0 = arith.constant 0 : i32
    %c0_i32_1 = arith.constant 0 : i32
    return %c0_i32, %c0_i32_0 : i32, i32
  }
  func.func @transform_7(%arg0: i32) -> (i32, i32) {
    %c0_i32 = arith.constant 0 : i32
    %c0_i32_0 = arith.constant 0 : i32
    return %arg0, %c0_i32 : i32, i32
  }
}

</mosaic_0001>

<llo_original>
// kernel: actor_critic_forward.1
$region0: #{actor_critic_forward.1}
  #allocation0 [shape = 'u32[]', space=smem, size = 0x4, offset = 0x4, fixed_abs, tag = 'smem constant byte address 0x4 - core index']
  #allocation1 [shape = 'u32[144,128]{1,0:T(1,128)}', space=vmem, size = 0x12000, scoped, tag = 'internal scratch']
  %s0 = inlined_call_operand.vmem [shape: bf16[8,16], index: 0, kind: input, shape index: {}]
  %s1 = inlined_call_operand.vmem [shape: bf16[16,256], index: 1, kind: input, shape index: {}]
  %s2 = inlined_call_operand.vmem [shape: f32[1,256], index: 2, kind: input, shape index: {}]
  %s3 = inlined_call_operand.hbm [shape: bf16[256,128], index: 3, kind: input, shape index: {}]
  %s4 = inlined_call_operand.vmem [shape: f32[1,128], index: 4, kind: input, shape index: {}]
  %s5 = inlined_call_operand.hbm [shape: bf16[128,128], index: 5, kind: input, shape index: {}]
  %s6 = inlined_call_operand.vmem [shape: f32[1,128], index: 6, kind: input, shape index: {}]
  %s7 = inlined_call_operand.vmem [shape: bf16[8,128], index: 7, kind: output, shape index: {}]
  %s8 = sld [smem:[#allocation0]]
  $region46: #{actor_critic_forward.1} parent=0
    _
  %s10 = ssub.s32 1, %s8
  %s11 = scalar_select 0, %s10, %s8
  $region1: #{actor_critic_forward.1} parent=0
    #allocation2 [shape = 'u8[65536]{0}', space=vmem, size = 0x10000, scoped, tag = 'input window, operand 3, single buffered']
    #allocation3 [shape = 's32[1]{0}', space=sflag, size = 0x4, scoped, tag = 'scoped memory for actor_critic_forward.1']
    #allocation4 [shape = 'u8[32768]{0}', space=vmem, size = 0x8000, scoped, tag = 'input window, operand 5, single buffered']
    #allocation5 [shape = 's32[1]{0}', space=sflag, size = 0x4, scoped, tag = 'scoped memory for actor_critic_forward.1']
    %12 = vsyncpa [#allocation3], 0
    %13 = vsyncpa [#allocation5], 0
    // Predicated region
    $region2: #{actor_critic_forward.1} parent=1 // pred_check
      _
    $region3: #{actor_critic_forward.1} parent=1 // pred_check_branch
      %15 = sbr.rel (0) target = $region5
    $region4: #{actor_critic_forward.1} parent=1 // pred_region
      _
    $region5: #{actor_critic_forward.1} parent=1 // pred_fallthru
      _
    // Predicated region
    $region6: #{actor_critic_forward.1} parent=1 // pred_check
      _
    $region7: #{actor_critic_forward.1} parent=1 // pred_check_branch
      %17 = sbr.rel (0) target = $region9
    $region8: #{actor_critic_forward.1} parent=1 // pred_region
      _
    $region9: #{actor_critic_forward.1} parent=1 // pred_fallthru
      _
    // Predicated region
    $region10: #{actor_critic_forward.1} parent=1 // pred_check
      _
    $region11: #{actor_critic_forward.1} parent=1 // pred_check_branch
      %19 = sbr.rel (0) target = $region13
    $region12: #{actor_critic_forward.1} parent=1 // pred_region
      _
    $region13: #{actor_critic_forward.1} parent=1 // pred_fallthru
      _
    // Predicated region
    $region14: #{actor_critic_forward.1} parent=1 // pred_check
      _
    $region15: #{actor_critic_forward.1} parent=1 // pred_check_branch
      %21 = sbr.rel (0) target = $region17
    $region16: #{actor_critic_forward.1} parent=1 // pred_region
      %s23 = ssub.s32 2048, 2048
      %24 = vsyncadd [#allocation3], %s23
      %s25 = sshll.u32 [#allocation2], 4
      %s26 = int_to_ptr.vmem [resolvable:$true] %s25
      %31 = dma.hbm_to_vmem [thread:$0]  %s3, 2048, %s26, [#allocation3], 64, 64, 4
    $region17: #{actor_critic_forward.1} parent=1 // pred_fallthru
      _
    // Predicated region
    $region18: #{actor_critic_forward.1} parent=1 // pred_check
      _
    $region19: #{actor_critic_forward.1} parent=1 // pred_check_branch
      %33 = sbr.rel (0) target = $region21
    $region20: #{actor_critic_forward.1} parent=1 // pred_region
      _
    $region21: #{actor_critic_forward.1} parent=1 // pred_fallthru
      _
    // Predicated region
    $region22: #{actor_critic_forward.1} parent=1 // pred_check
      _
    $region23: #{actor_critic_forward.1} parent=1 // pred_check_branch
      %35 = sbr.rel (0) target = $region25
    $region24: #{actor_critic_forward.1} parent=1 // pred_region
      %s37 = ssub.s32 1024, 1024
      %38 = vsyncadd [#allocation5], %s37
      %s39 = sshll.u32 [#allocation4], 4
      %s40 = int_to_ptr.vmem [resolvable:$true] %s39
      %45 = dma.hbm_to_vmem [thread:$0]  %s5, 1024, %s40, [#allocation5], 64, 64, 4
    $region25: #{actor_critic_forward.1} parent=1 // pred_fallthru
      _
    // Predicated region
    $region26: #{actor_critic_forward.1} parent=1 // pred_check
      _
    $region27: #{actor_critic_forward.1} parent=1 // pred_check_branch
      %47 = sbr.rel (0) target = $region29
    $region28: #{actor_critic_forward.1} parent=1 // pred_region
      _
    $region29: #{actor_critic_forward.1} parent=1 // pred_fallthru
      _
    // Predicated region
    $region30: #{actor_critic_forward.1} parent=1 // pred_check
      _
    $region31: #{actor_critic_forward.1} parent=1 // pred_check_branch
      %49 = sbr.rel (0) target = $region33
    $region32: #{actor_critic_forward.1} parent=1 // pred_region
      %50 = dma.done [#allocation3], 2048
    $region33: #{actor_critic_forward.1} parent=1 // pred_fallthru
      _
    // Predicated region
    $region34: #{actor_critic_forward.1} parent=1 // pred_check
      _
    $region35: #{actor_critic_forward.1} parent=1 // pred_check_branch
      %52 = sbr.rel (0) target = $region37
    $region36: #{actor_critic_forward.1} parent=1 // pred_region
      %53 = dma.done [#allocation5], 1024
    $region37: #{actor_critic_forward.1} parent=1 // pred_fallthru
      _
    %v55 = vld [vmem:[%s0] sm:$0xf]
    %v56 = vld [vmem:[%s1] sm:$0xff]
    %v57 = vld [vmem:[%s1 + $0x8] sm:$0xff]
    %v58 = vld [vmem:[%s2] sm:$0x3]
    %v60 = vlaneseq
    %v61 = vshrl.u32 %v60, 7
    %v62 = vsub.s32 0, %v61
    %v63 = vrot.slane %v58, %v62
    %v64 = vlaneseq
    %v65 = vshrl.u32 %v64, 7
    %v66 = vsub.s32 1, %v65
    %v67 = vrot.slane %v58, %v66
    %v72 = vunpack.c.l.b16 %v56
    %v73 = vunpack.c.h.b16 %v56
    %v74 = vunpack.c.l.b16 %v57
    %v75 = vunpack.c.h.b16 %v57
    %v76 = vpack.c.b16 %v74, %v72
    %v77 = vpack.c.b16 %v75, %v73
    %vm80 = vcmask 130048
    %v82 = vsel %vm80, %v55, 0
    %84 = vmatprep.subr.bf16.mxu0 %v77
    %85 = vmatpush1.bf16.msra.mxu0 %v76
    %86 = vmatprep.subr.bf16.mxu0 0
    %87 = vmatpush1.bf16.msra.mxu0 0
    %88 = vmatprep.subr.bf16.mxu0 0
    %89 = vmatpush1.bf16.msra.mxu0 0
    %90 = vmatprep.subr.bf16.mxu0 0
    %91 = vmatpush1.bf16.msra.mxu0 0
    %92 = vmatprep.subr.bf16.mxu0 0
    %93 = vmatpush1.bf16.msra.mxu0 0
    %94 = vmatprep.subr.bf16.mxu0 0
    %95 = vmatpush1.bf16.msra.mxu0 0
    %96 = vmatprep.subr.bf16.mxu0 0
    %97 = vmatpush1.bf16.msra.mxu0 0
    %98 = vmatprep.subr.bf16.mxu0 0
    %99 = vmatpush1.bf16.msra.mxu0 0
    %100 = vmatprep.subr.bf16.mxu0 0
    %101 = vmatpush1.bf16.msra.mxu0 0
    %102 = vmatprep.subr.bf16.mxu0 0
    %103 = vmatpush1.bf16.msra.mxu0 0
    %104 = vmatprep.subr.bf16.mxu0 0
    %105 = vmatpush1.bf16.msra.mxu0 0
    %106 = vmatprep.subr.bf16.mxu0 0
    %107 = vmatpush1.bf16.msra.mxu0 0
    %108 = vmatprep.subr.bf16.mxu0 0
    %109 = vmatpush1.bf16.msra.mxu0 0
    %110 = vmatprep.subr.bf16.mxu0 0
    %111 = vmatpush1.bf16.msra.mxu0 0
    %112 = vmatprep.subr.bf16.mxu0 0
    %113 = vmatpush1.bf16.msra.mxu0 0
    %114 = vmatprep.subr.bf16.mxu0 0
    %115 = vmatpush1.bf16.msra.mxu0 0
    %116 = vmatprep.mubr.bf16.mxu0 0
    %117 = vmatmul.mubr.bf16.gmra.mrb[0].mxu0 %v82
    %v118 = vpop.f32.mrb[0].mxu0
    %v119 = vadd.f32 %v63, %v118
    %v120 = vpop.f32.mrb[0].mxu0
    %v121 = vadd.f32 %v67, %v120
    %v122 = vpop.f32.mrb[0].mxu0
    %v123 = vpop.f32.mrb[0].mxu0
    %124 = vdwg.mxu0
    %v125 = vmax.f32 %v119, 0.0
    %v126 = vmax.f32 %v121, 0.0
    %v127 = vpack.c.bf16 %v125, %v125
    %v128 = vpack.c.bf16 %v126, %v126
    %v129 = vld [vmem:[#allocation2] sm:$0xf]
    %v130 = vld [vmem:[#allocation2 + $0x4] sm:$0xf]
    %v131 = vld [vmem:[#allocation2 + $0x8] sm:$0xf]
    %v132 = vld [vmem:[#allocation2 + $0xc] sm:$0xf]
    %v133 = vld [vmem:[#allocation2 + $0x10] sm:$0xf]
    %v134 = vld [vmem:[#allocation2 + $0x14] sm:$0xf]
    %v135 = vld [vmem:[#allocation2 + $0x18] sm:$0xf]
    %v136 = vld [vmem:[#allocation2 + $0x1c] sm:$0xf]
    %v137 = vld [vmem:[#allocation2 + $0x20] sm:$0xf]
    %v138 = vld [vmem:[#allocation2 + $0x24] sm:$0xf]
    %v139 = vld [vmem:[#allocation2 + $0x28] sm:$0xf]
    %v140 = vld [vmem:[#allocation2 + $0x2c] sm:$0xf]
    %v141 = vld [vmem:[#allocation2 + $0x30] sm:$0xf]
    %v142 = vld [vmem:[#allocation2 + $0x34] sm:$0xf]
    %v143 = vld [vmem:[#allocation2 + $0x38] sm:$0xf]
    %v144 = vld [vmem:[#allocation2 + $0x3c] sm:$0xf]
    %v145 = vld [vmem:[#allocation2 + $0x40] sm:$0xf]
    %v146 = vld [vmem:[#allocation2 + $0x44] sm:$0xf]
    %v147 = vld [vmem:[#allocation2 + $0x48] sm:$0xf]
    %v148 = vld [vmem:[#allocation2 + $0x4c] sm:$0xf]
    %v149 = vld [vmem:[#allocation2 + $0x50] sm:$0xf]
    %v150 = vld [vmem:[#allocation2 + $0x54] sm:$0xf]
    %v151 = vld [vmem:[#allocation2 + $0x58] sm:$0xf]
    %v152 = vld [vmem:[#allocation2 + $0x5c] sm:$0xf]
    %v153 = vld [vmem:[#allocation2 + $0x60] sm:$0xf]
    %v154 = vld [vmem:[#allocation2 + $0x64] sm:$0xf]
    %v155 = vld [vmem:[#allocation2 + $0x68] sm:$0xf]
    %v156 = vld [vmem:[#allocation2 + $0x6c] sm:$0xf]
    %v157 = vld [vmem:[#allocation2 + $0x70] sm:$0xf]
    %v158 = vld [vmem:[#allocation2 + $0x74] sm:$0xf]
    %v159 = vld [vmem:[#allocation2 + $0x78] sm:$0xf]
    %v160 = vld [vmem:[#allocation2 + $0x7c] sm:$0xf]
    %v161 = vld [vmem:[%s4] sm:$0x1]
    %v163 = vlaneseq
    %v164 = vshrl.u32 %v163, 7
    %v165 = vsub.s32 0, %v164
    %v166 = vrot.slane %v161, %v165
    %v200 = vunpack.c.l.b16 %v129
    %v201 = vunpack.c.l.b16 %v130
    %v202 = vunpack.c.l.b16 %v131
    %v203 = vunpack.c.l.b16 %v132
    %v204 = vunpack.c.l.b16 %v133
    %v205 = vunpack.c.l.b16 %v134
    %v206 = vunpack.c.l.b16 %v135
    %v207 = vunpack.c.l.b16 %v136
    %v208 = vunpack.c.l.b16 %v137
    %v209 = vunpack.c.l.b16 %v138
    %v210 = vunpack.c.l.b16 %v139
    %v211 = vunpack.c.l.b16 %v140
    %v212 = vunpack.c.l.b16 %v141
    %v213 = vunpack.c.l.b16 %v142
    %v214 = vunpack.c.l.b16 %v143
    %v215 = vunpack.c.l.b16 %v144
    %v216 = vunpack.c.l.b16 %v145
    %v217 = vunpack.c.l.b16 %v146
    %v218 = vunpack.c.l.b16 %v147
    %v219 = vunpack.c.l.b16 %v148
    %v220 = vunpack.c.l.b16 %v149
    %v221 = vunpack.c.l.b16 %v150
    %v222 = vunpack.c.l.b16 %v151
    %v223 = vunpack.c.l.b16 %v152
    %v224 = vunpack.c.l.b16 %v153
    %v225 = vunpack.c.l.b16 %v154
    %v226 = vunpack.c.l.b16 %v155
    %v227 = vunpack.c.l.b16 %v156
    %v228 = vunpack.c.l.b16 %v157
    %v229 = vunpack.c.l.b16 %v158
    %v230 = vunpack.c.l.b16 %v159
    %v231 = vunpack.c.l.b16 %v160
    %v232 = vpack.c.b16 %v201, %v200
    %v233 = vpack.c.b16 %v203, %v202
    %v234 = vpack.c.b16 %v205, %v204
    %v235 = vpack.c.b16 %v207, %v206
    %v236 = vpack.c.b16 %v209, %v208
    %v237 = vpack.c.b16 %v211, %v210
    %v238 = vpack.c.b16 %v213, %v212
    %v239 = vpack.c.b16 %v215, %v214
    %v240 = vpack.c.b16 %v217, %v216
    %v241 = vpack.c.b16 %v219, %v218
    %v242 = vpack.c.b16 %v221, %v220
    %v243 = vpack.c.b16 %v223, %v222
    %v244 = vpack.c.b16 %v225, %v224
    %v245 = vpack.c.b16 %v227, %v226
    %v246 = vpack.c.b16 %v229, %v228
    %v247 = vpack.c.b16 %v231, %v230
    %264 = vmatprep.subr.bf16.mxu0 0
    %265 = vmatpush1.bf16.msra.mxu0 %v232
    %266 = vmatprep.subr.bf16.mxu0 0
    %267 = vmatpush1.bf16.msra.mxu0 %v233
    %268 = vmatprep.subr.bf16.mxu0 0
    %269 = vmatpush1.bf16.msra.mxu0 %v234
    %270 = vmatprep.subr.bf16.mxu0 0
    %271 = vmatpush1.bf16.msra.mxu0 %v235
    %272 = vmatprep.subr.bf16.mxu0 0
    %273 = vmatpush1.bf16.msra.mxu0 %v236
    %274 = vmatprep.subr.bf16.mxu0 0
    %275 = vmatpush1.bf16.msra.mxu0 %v237
    %276 = vmatprep.subr.bf16.mxu0 0
    %277 = vmatpush1.bf16.msra.mxu0 %v238
    %278 = vmatprep.subr.bf16.mxu0 0
    %279 = vmatpush1.bf16.msra.mxu0 %v239
    %280 = vmatprep.subr.bf16.mxu0 0
    %281 = vmatpush1.bf16.msra.mxu0 %v240
    %282 = vmatprep.subr.bf16.mxu0 0
    %283 = vmatpush1.bf16.msra.mxu0 %v241
    %284 = vmatprep.subr.bf16.mxu0 0
    %285 = vmatpush1.bf16.msra.mxu0 %v242
    %286 = vmatprep.subr.bf16.mxu0 0
    %287 = vmatpush1.bf16.msra.mxu0 %v243
    %288 = vmatprep.subr.bf16.mxu0 0
    %289 = vmatpush1.bf16.msra.mxu0 %v244
    %290 = vmatprep.subr.bf16.mxu0 0
    %291 = vmatpush1.bf16.msra.mxu0 %v245
    %292 = vmatprep.subr.bf16.mxu0 0
    %293 = vmatpush1.bf16.msra.mxu0 %v246
    %294 = vmatprep.subr.bf16.mxu0 0
    %295 = vmatpush1.bf16.msra.mxu0 %v247
    %296 = vmatprep.mubr.bf16.mxu0 %v128
    %297 = vmatmul.mubr.bf16.gmra.mrb[0].mxu0 %v127
    %v298 = vpop.f32.mrb[0].mxu0
    %v299 = vadd.f32 %v166, %v298
    %v300 = vpop.f32.mrb[0].mxu0
    %v301 = vpop.f32.mrb[0].mxu0
    %v302 = vpop.f32.mrb[0].mxu0
    %303 = vdwg.mxu0
    %v304 = vmax.f32 %v299, 0.0
    %v305 = vpack.c.bf16 %v304, %v304
    %v306 = vld [vmem:[#allocation4] sm:$0xf]
    %v307 = vld [vmem:[#allocation4 + $0x4] sm:$0xf]
    %v308 = vld [vmem:[#allocation4 + $0x8] sm:$0xf]
    %v309 = vld [vmem:[#allocation4 + $0xc] sm:$0xf]
    %v310 = vld [vmem:[#allocation4 + $0x10] sm:$0xf]
    %v311 = vld [vmem:[#allocation4 + $0x14] sm:$0xf]
    %v312 = vld [vmem:[#allocation4 + $0x18] sm:$0xf]
    %v313 = vld [vmem:[#allocation4 + $0x1c] sm:$0xf]
    %v314 = vld [vmem:[#allocation4 + $0x20] sm:$0xf]
    %v315 = vld [vmem:[#allocation4 + $0x24] sm:$0xf]
    %v316 = vld [vmem:[#allocation4 + $0x28] sm:$0xf]
    %v317 = vld [vmem:[#allocation4 + $0x2c] sm:$0xf]
    %v318 = vld [vmem:[#allocation4 + $0x30] sm:$0xf]
    %v319 = vld [vmem:[#allocation4 + $0x34] sm:$0xf]
    %v320 = vld [vmem:[#allocation4 + $0x38] sm:$0xf]
    %v321 = vld [vmem:[#allocation4 + $0x3c] sm:$0xf]
    %v322 = vld [vmem:[%s6] sm:$0x1]
    %v324 = vlaneseq
    %v325 = vshrl.u32 %v324, 7
    %v326 = vsub.s32 0, %v325
    %v327 = vrot.slane %v322, %v326
    %v345 = vunpack.c.l.b16 %v306
    %v346 = vunpack.c.l.b16 %v307
    %v347 = vunpack.c.l.b16 %v308
    %v348 = vunpack.c.l.b16 %v309
    %v349 = vunpack.c.l.b16 %v310
    %v350 = vunpack.c.l.b16 %v311
    %v351 = vunpack.c.l.b16 %v312
    %v352 = vunpack.c.l.b16 %v313
    %v353 = vunpack.c.l.b16 %v314
    %v354 = vunpack.c.l.b16 %v315
    %v355 = vunpack.c.l.b16 %v316
    %v356 = vunpack.c.l.b16 %v317
    %v357 = vunpack.c.l.b16 %v318
    %v358 = vunpack.c.l.b16 %v319
    %v359 = vunpack.c.l.b16 %v320
    %v360 = vunpack.c.l.b16 %v321
    %v361 = vpack.c.b16 %v346, %v345
    %v362 = vpack.c.b16 %v348, %v347
    %v363 = vpack.c.b16 %v350, %v349
    %v364 = vpack.c.b16 %v352, %v351
    %v365 = vpack.c.b16 %v354, %v353
    %v366 = vpack.c.b16 %v356, %v355
    %v367 = vpack.c.b16 %v358, %v357
    %v368 = vpack.c.b16 %v360, %v359
    %377 = vmatprep.subr.bf16.mxu0 0
    %378 = vmatpush1.bf16.msra.mxu0 %v361
    %379 = vmatprep.subr.bf16.mxu0 0
    %380 = vmatpush1.bf16.msra.mxu0 %v362
    %381 = vmatprep.subr.bf16.mxu0 0
    %382 = vmatpush1.bf16.msra.mxu0 %v363
    %383 = vmatprep.subr.bf16.mxu0 0
    %384 = vmatpush1.bf16.msra.mxu0 %v364
    %385 = vmatprep.subr.bf16.mxu0 0
    %386 = vmatpush1.bf16.msra.mxu0 %v365
    %387 = vmatprep.subr.bf16.mxu0 0
    %388 = vmatpush1.bf16.msra.mxu0 %v366
    %389 = vmatprep.subr.bf16.mxu0 0
    %390 = vmatpush1.bf16.msra.mxu0 %v367
    %391 = vmatprep.subr.bf16.mxu0 0
    %392 = vmatpush1.bf16.msra.mxu0 %v368
    %393 = vmatprep.subr.bf16.mxu0 0
    %394 = vmatpush1.bf16.msra.mxu0 0
    %395 = vmatprep.subr.bf16.mxu0 0
    %396 = vmatpush1.bf16.msra.mxu0 0
    %397 = vmatprep.subr.bf16.mxu0 0
    %398 = vmatpush1.bf16.msra.mxu0 0
    %399 = vmatprep.subr.bf16.mxu0 0
    %400 = vmatpush1.bf16.msra.mxu0 0
    %401 = vmatprep.subr.bf16.mxu0 0
    %402 = vmatpush1.bf16.msra.mxu0 0
    %403 = vmatprep.subr.bf16.mxu0 0
    %404 = vmatpush1.bf16.msra.mxu0 0
    %405 = vmatprep.subr.bf16.mxu0 0
    %406 = vmatpush1.bf16.msra.mxu0 0
    %407 = vmatprep.subr.bf16.mxu0 0
    %408 = vmatpush1.bf16.msra.mxu0 0
    %409 = vmatprep.mubr.bf16.mxu0 0
    %410 = vmatmul.mubr.bf16.gmra.mrb[0].mxu0 %v305
    %v411 = vpop.f32.mrb[0].mxu0
    %v412 = vadd.f32 %v327, %v411
    %v413 = vpop.f32.mrb[0].mxu0
    %v414 = vpop.f32.mrb[0].mxu0
    %v415 = vpop.f32.mrb[0].mxu0
    %416 = vdwg.mxu0
    %v417 = vlaneseq
    %v418 = vand.u32 %v417, 127
    %vm419 = vcmp.ge.s32.totalorder %v418, 4
    %vm420 = vcmp.lt.s32.totalorder %v418, 8
    %vm421 = vmand %vm419, %vm420
    %v422 = vmul.f32 %v412, 1.442695
    %v423 = vpow.pop %v422
    %v424 = vsel %vm421, 1, 0
    %vm425 = vcmp.eq.s32.totalorder %v424, 1
    %v426 = vsel %vm425, %v423, %v412
    %v427 = vpack.c.bf16 %v426, %v426
    %428 = vst [vmem:[%s7] sm:$0xf] %v427
    // Predicated region
    $region38: #{actor_critic_forward.1} parent=1 // pred_check
      _
    $region39: #{actor_critic_forward.1} parent=1 // pred_check_branch
      %430 = sbr.rel (0) target = $region41
    $region40: #{actor_critic_forward.1} parent=1 // pred_region
      _
    $region41: #{actor_critic_forward.1} parent=1 // pred_fallthru
      _
    // Predicated region
    $region42: #{actor_critic_forward.1} parent=1 // pred_check
      _
    $region43: #{actor_critic_forward.1} parent=1 // pred_check_branch
      %432 = sbr.rel (0) target = $region45
    $region44: #{actor_critic_forward.1} parent=1 // pred_region
      _
    $region45: #{actor_critic_forward.1} parent=1 // pred_fallthru
      _
    %433 = vsyncpa [#allocation3], 1
    %434 = vsyncpa [#allocation5], 1

</llo_original>
